<compile_context>
chip_gen: v7x
topology: tpu7x:2x2x1
jax: 0.10.0
libtpu: 0.0.40
codegen_flags: <defaults>
</compile_context>

<pallas_src>
import functools
import math

import jax
import jax.numpy as jnp
from jax.experimental import pallas as pl
from jax.experimental.pallas import tpu as pltpu


def toy_model_kernel(x_ref, w_ref, b_ref, o_ref, *, n_inst, n_feats):
    # x_ref: (TB, n_inst*n_feats)   w_ref: (n_inst, d_hidden, n_feats)
    # b_ref: (n_inst, n_feats)      o_ref: (TB, n_inst*n_feats)
    x = x_ref[...]
    w = w_ref[...]
    b = b_ref[...]
    for i in range(n_inst):                      # static unroll; n_inst is small
        lo = i * n_feats
        xi = x[:, lo:lo + n_feats]               # (TB, F)  static lane slice
        wi = w[i]                                # (H, F)
        # h = x @ W^T without materializing a transpose: contract the feats axes directly.
        h = jax.lax.dot_general(
            xi, wi, dimension_numbers=(((1,), (1,)), ((), ())),
            preferred_element_type=jnp.float32)                  # (TB, H)
        oi = jax.lax.dot_general(
            h, wi, dimension_numbers=(((1,), (0,)), ((), ())),
            preferred_element_type=jnp.float32)                  # (TB, F)
        oi = jnp.maximum(oi + b[i:i + 1, :], 0.0)                # bias + ReLU
        o_ref[:, lo:lo + n_feats] = oi.astype(o_ref.dtype)


def toy_model_forward(features, W, b_final, *, batch_tile=512):
    """
    features: (batch, n_inst, n_features) float32
    W:        (n_inst, d_hidden, n_features) float32
    b_final:  (n_inst, n_features) float32
    returns:  (batch, n_inst, n_features) float32
    """
    batch, n_inst, n_feats = features.shape
    _, d_hidden, _ = W.shape

    # Free, contiguous reshape (metadata only; no HBM read/write like a transpose).
    x2d = features.reshape(batch, n_inst * n_feats)

    # Whole batch in one block at toy sizes (grid of 1 == no per-step overhead);
    # cap the tile (multiple of 8) if batch ever scales so tiles fit VMEM.
    tb = batch if batch <= batch_tile else batch_tile
    grid = (pl.cdiv(batch, tb),)

    out2d = pl.pallas_call(
        functools.partial(toy_model_kernel, n_inst=n_inst, n_feats=n_feats),
        out_shape=jax.ShapeDtypeStruct((batch, n_inst * n_feats), features.dtype),
        grid_spec=pltpu.PrefetchScalarGridSpec(
            num_scalar_prefetch=0,
            grid=grid,
            in_specs=[
                pl.BlockSpec((tb, n_inst * n_feats), lambda bi: (bi, 0)),
                # W / b_final: constant index_map -> resident in VMEM, never re-DMA'd.
                pl.BlockSpec((n_inst, d_hidden, n_feats), lambda bi: (0, 0, 0)),
                pl.BlockSpec((n_inst, n_feats), lambda bi: (0, 0)),
            ],
            out_specs=pl.BlockSpec((tb, n_inst * n_feats), lambda bi: (bi, 0)),
        ),
        compiler_params=pltpu.CompilerParams(
            dimension_semantics=("parallel",),   # batch tiles split across TCs on v7x
        ),
    )(x2d, W, b_final)

    return out2d.reshape(batch, n_inst, n_feats)


def init_params(key, n_inst, d_hidden, n_feats):
    # Xavier-normal init matching nn.init.xavier_normal_ on a (n_inst, d_hidden, n_feats) tensor:
    #   fan_in = d_hidden * n_feats, fan_out = n_inst * n_feats (torch fan rules for >2-D tensors)
    fan_in = d_hidden * n_feats
    fan_out = n_inst * n_feats
    std = math.sqrt(2.0 / (fan_in + fan_out))
    W = std * jax.random.normal(key, (n_inst, d_hidden, n_feats), dtype=jnp.float32)
    b_final = jnp.zeros((n_inst, n_feats), dtype=jnp.float32)
    return W, b_final


if __name__ == "__main__":
    # small shapes consistent with ToyModelConfig defaults
    n_inst, n_feats, d_hidden, batch = 4, 5, 2, 8

    key = jax.random.PRNGKey(0)
    k_w, k_x = jax.random.split(key)

    W, b_final = init_params(k_w, n_inst, d_hidden, n_feats)
    features = jax.random.uniform(k_x, (batch, n_inst, n_feats), dtype=jnp.float32)

    out = toy_model_forward(features, W, b_final)
    out = jax.block_until_ready(out)

    # reference check in plain JAX (same einsum semantics as the PyTorch module)
    h_ref = jnp.einsum("bif,ihf->bih", features, W)
    out_ref = jnp.maximum(jnp.einsum("bih,ihf->bif", h_ref, W) + b_final[None], 0.0)
    assert out.shape == (batch, n_inst, n_feats)
    assert jnp.allclose(out, out_ref, atol=1e-5, rtol=1e-5)

    print("KERNEL_OK")
</pallas_src>

<mosaic_0001>
module attributes {stable_mosaic.version = 11 : i64} {
  func.func @toy_model_kernel(%arg0: i32, %arg1: memref<8x20xf32, #tpu.memory_space<vmem>>, %arg2: memref<4x2x5xf32, #tpu.memory_space<vmem>>, %arg3: memref<4x5xf32, #tpu.memory_space<vmem>>, %arg4: memref<8x20xf32, #tpu.memory_space<vmem>>) attributes {dimension_semantics = [#tpu.dimension_semantics<parallel>], iteration_bounds = array<i64: 1>, scalar_prefetch = 0 : i64, scratch_operands = 0 : i64, tpu.core_type = #tpu.core_type<tc>, window_params = [{transform_indices = @transform_0, window_bounds = array<i64: 8, 20>}, {pipeline_mode = #tpu.pipeline_mode<synchronous>, transform_indices = @transform_1, window_bounds = array<i64: 4, 2, 5>}, {pipeline_mode = #tpu.pipeline_mode<synchronous>, transform_indices = @transform_2, window_bounds = array<i64: 4, 5>}, {transform_indices = @transform_3, window_bounds = array<i64: 8, 20>}]} {
    %c0 = arith.constant 0 : index
    %c0_0 = arith.constant 0 : index
    %0 = vector.load %arg1[%c0, %c0_0] : memref<8x20xf32, #tpu.memory_space<vmem>>, vector<8x20xf32>
    %c0_1 = arith.constant 0 : index
    %c0_2 = arith.constant 0 : index
    %c0_3 = arith.constant 0 : index
    %1 = vector.load %arg2[%c0_1, %c0_2, %c0_3] : memref<4x2x5xf32, #tpu.memory_space<vmem>>, vector<4x2x5xf32>
    %c0_4 = arith.constant 0 : index
    %c0_5 = arith.constant 0 : index
    %2 = vector.load %arg3[%c0_4, %c0_5] : memref<4x5xf32, #tpu.memory_space<vmem>>, vector<4x5xf32>
    %3 = vector.extract_strided_slice %0 {offsets = [0, 0], sizes = [8, 5], strides = [1, 1]} : vector<8x20xf32> to vector<8x5xf32>
    %4 = vector.extract_strided_slice %1 {offsets = [0, 0, 0], sizes = [1, 2, 5], strides = [1, 1, 1]} : vector<4x2x5xf32> to vector<1x2x5xf32>
    %5 = vector.shape_cast %4 : vector<1x2x5xf32> to vector<2x5xf32>
    %cst = arith.constant dense<0.000000e+00> : vector<8x2xf32>
    %6 = tpu.matmul %3, %5, %cst {dimension_numbers = #tpu.dot_dimension_numbers<[1], [1], [0], [0], [0, 0, 1, 0], [], []>} : vector<8x5xf32>, vector<2x5xf32>, vector<8x2xf32> -> vector<8x2xf32>
    %cst_6 = arith.constant dense<0.000000e+00> : vector<8x5xf32>
    %7 = tpu.matmul %6, %5, %cst_6 {dimension_numbers = #tpu.dot_dimension_numbers<[1], [0], [0], [1], [0, 0, 1, 1], [], []>} : vector<8x2xf32>, vector<2x5xf32>, vector<8x5xf32> -> vector<8x5xf32>
    %8 = vector.extract_strided_slice %2 {offsets = [0, 0], sizes = [1, 5], strides = [1, 1]} : vector<4x5xf32> to vector<1x5xf32>
    %9 = vector.broadcast %8 : vector<1x5xf32> to vector<8x5xf32>
    %10 = arith.addf %7, %9 : vector<8x5xf32>
    %cst_7 = arith.constant 0.000000e+00 : f32
    %11 = vector.broadcast %cst_7 : f32 to vector<8x5xf32>
    %12 = arith.maximumf %10, %11 : vector<8x5xf32>
    %c0_8 = arith.constant 0 : index
    %c0_9 = arith.constant 0 : index
    %13 = vector.load %arg4[%c0_8, %c0_9] : memref<8x20xf32, #tpu.memory_space<vmem>>, vector<8x5xf32>
    tpu.vector_store %arg4[%c0_8, %c0_9], %12 {strides = array<i32>} : memref<8x20xf32, #tpu.memory_space<vmem>>, vector<8x5xf32>,
    %14 = vector.extract_strided_slice %0 {offsets = [0, 5], sizes = [8, 5], strides = [1, 1]} : vector<8x20xf32> to vector<8x5xf32>
    %15 = vector.extract_strided_slice %1 {offsets = [1, 0, 0], sizes = [1, 2, 5], strides = [1, 1, 1]} : vector<4x2x5xf32> to vector<1x2x5xf32>
    %16 = vector.shape_cast %15 : vector<1x2x5xf32> to vector<2x5xf32>
    %cst_10 = arith.constant dense<0.000000e+00> : vector<8x2xf32>
    %17 = tpu.matmul %14, %16, %cst_10 {dimension_numbers = #tpu.dot_dimension_numbers<[1], [1], [0], [0], [0, 0, 1, 0], [], []>} : vector<8x5xf32>, vector<2x5xf32>, vector<8x2xf32> -> vector<8x2xf32>
    %cst_11 = arith.constant dense<0.000000e+00> : vector<8x5xf32>
    %18 = tpu.matmul %17, %16, %cst_11 {dimension_numbers = #tpu.dot_dimension_numbers<[1], [0], [0], [1], [0, 0, 1, 1], [], []>} : vector<8x2xf32>, vector<2x5xf32>, vector<8x5xf32> -> vector<8x5xf32>
    %19 = vector.extract_strided_slice %2 {offsets = [1, 0], sizes = [1, 5], strides = [1, 1]} : vector<4x5xf32> to vector<1x5xf32>
    %20 = vector.broadcast %19 : vector<1x5xf32> to vector<8x5xf32>
    %21 = arith.addf %18, %20 : vector<8x5xf32>
    %cst_12 = arith.constant 0.000000e+00 : f32
    %22 = vector.broadcast %cst_12 : f32 to vector<8x5xf32>
    %23 = arith.maximumf %21, %22 : vector<8x5xf32>
    %c0_13 = arith.constant 0 : index
    %c5 = arith.constant 5 : index
    %24 = vector.load %arg4[%c0_13, %c5] : memref<8x20xf32, #tpu.memory_space<vmem>>, vector<8x5xf32>
    tpu.vector_store %arg4[%c0_13, %c5], %23 {strides = array<i32>} : memref<8x20xf32, #tpu.memory_space<vmem>>, vector<8x5xf32>,
    %25 = vector.extract_strided_slice %0 {offsets = [0, 10], sizes = [8, 5], strides = [1, 1]} : vector<8x20xf32> to vector<8x5xf32>
    %26 = vector.extract_strided_slice %1 {offsets = [2, 0, 0], sizes = [1, 2, 5], strides = [1, 1, 1]} : vector<4x2x5xf32> to vector<1x2x5xf32>
    %27 = vector.shape_cast %26 : vector<1x2x5xf32> to vector<2x5xf32>
    %cst_14 = arith.constant dense<0.000000e+00> : vector<8x2xf32>
    %28 = tpu.matmul %25, %27, %cst_14 {dimension_numbers = #tpu.dot_dimension_numbers<[1], [1], [0], [0], [0, 0, 1, 0], [], []>} : vector<8x5xf32>, vector<2x5xf32>, vector<8x2xf32> -> vector<8x2xf32>
    %cst_15 = arith.constant dense<0.000000e+00> : vector<8x5xf32>
    %29 = tpu.matmul %28, %27, %cst_15 {dimension_numbers = #tpu.dot_dimension_numbers<[1], [0], [0], [1], [0, 0, 1, 1], [], []>} : vector<8x2xf32>, vector<2x5xf32>, vector<8x5xf32> -> vector<8x5xf32>
    %30 = vector.extract_strided_slice %2 {offsets = [2, 0], sizes = [1, 5], strides = [1, 1]} : vector<4x5xf32> to vector<1x5xf32>
    %31 = vector.broadcast %30 : vector<1x5xf32> to vector<8x5xf32>
    %32 = arith.addf %29, %31 : vector<8x5xf32>
    %cst_16 = arith.constant 0.000000e+00 : f32
    %33 = vector.broadcast %cst_16 : f32 to vector<8x5xf32>
    %34 = arith.maximumf %32, %33 : vector<8x5xf32>
    %c0_17 = arith.constant 0 : index
    %c10 = arith.constant 10 : index
    %35 = vector.load %arg4[%c0_17, %c10] : memref<8x20xf32, #tpu.memory_space<vmem>>, vector<8x5xf32>
    tpu.vector_store %arg4[%c0_17, %c10], %34 {strides = array<i32>} : memref<8x20xf32, #tpu.memory_space<vmem>>, vector<8x5xf32>,
    %36 = vector.extract_strided_slice %0 {offsets = [0, 15], sizes = [8, 5], strides = [1, 1]} : vector<8x20xf32> to vector<8x5xf32>
    %37 = vector.extract_strided_slice %1 {offsets = [3, 0, 0], sizes = [1, 2, 5], strides = [1, 1, 1]} : vector<4x2x5xf32> to vector<1x2x5xf32>
    %38 = vector.shape_cast %37 : vector<1x2x5xf32> to vector<2x5xf32>
    %cst_18 = arith.constant dense<0.000000e+00> : vector<8x2xf32>
    %39 = tpu.matmul %36, %38, %cst_18 {dimension_numbers = #tpu.dot_dimension_numbers<[1], [1], [0], [0], [0, 0, 1, 0], [], []>} : vector<8x5xf32>, vector<2x5xf32>, vector<8x2xf32> -> vector<8x2xf32>
    %cst_19 = arith.constant dense<0.000000e+00> : vector<8x5xf32>
    %40 = tpu.matmul %39, %38, %cst_19 {dimension_numbers = #tpu.dot_dimension_numbers<[1], [0], [0], [1], [0, 0, 1, 1], [], []>} : vector<8x2xf32>, vector<2x5xf32>, vector<8x5xf32> -> vector<8x5xf32>
    %41 = vector.extract_strided_slice %2 {offsets = [3, 0], sizes = [1, 5], strides = [1, 1]} : vector<4x5xf32> to vector<1x5xf32>
    %42 = vector.broadcast %41 : vector<1x5xf32> to vector<8x5xf32>
    %43 = arith.addf %40, %42 : vector<8x5xf32>
    %cst_20 = arith.constant 0.000000e+00 : f32
    %44 = vector.broadcast %cst_20 : f32 to vector<8x5xf32>
    %45 = arith.maximumf %43, %44 : vector<8x5xf32>
    %c0_21 = arith.constant 0 : index
    %c15 = arith.constant 15 : index
    %46 = vector.load %arg4[%c0_21, %c15] : memref<8x20xf32, #tpu.memory_space<vmem>>, vector<8x5xf32>
    tpu.vector_store %arg4[%c0_21, %c15], %45 {strides = array<i32>} : memref<8x20xf32, #tpu.memory_space<vmem>>, vector<8x5xf32>,
    return
  }
  func.func @transform_0(%arg0: i32) -> (i32, i32) {
    %c0_i32 = arith.constant 0 : i32
    %c0_i32_0 = arith.constant 0 : i32
    return %arg0, %c0_i32 : i32, i32
  }
  func.func @transform_1(%arg0: i32) -> (i32, i32, i32) {
    %c0_i32 = arith.constant 0 : i32
    %c0_i32_0 = arith.constant 0 : i32
    %c0_i32_1 = arith.constant 0 : i32
    %c0_i32_2 = arith.constant 0 : i32
    return %c0_i32, %c0_i32_0, %c0_i32_1 : i32, i32, i32
  }
  func.func @transform_2(%arg0: i32) -> (i32, i32) {
    %c0_i32 = arith.constant 0 : i32
    %c0_i32_0 = arith.constant 0 : i32
    %c0_i32_1 = arith.constant 0 : i32
    return %c0_i32, %c0_i32_0 : i32, i32
  }
  func.func @transform_3(%arg0: i32) -> (i32, i32) {
    %c0_i32 = arith.constant 0 : i32
    %c0_i32_0 = arith.constant 0 : i32
    return %arg0, %c0_i32 : i32, i32
  }
}

</mosaic_0001>

<llo_original>
// kernel: tpu_custom_call.1
$region0: #{tpu_custom_call.1}
  #allocation0 [shape = 'u32[]', space=smem, size = 0x4, offset = 0x4, fixed_abs, tag = 'smem constant byte address 0x4 - core index']
  #allocation1 [shape = 'u32[144,128]{1,0:T(1,128)}', space=vmem, size = 0x12000, scoped, tag = 'internal scratch']
  %s0 = inlined_call_operand.hbm [shape: f32[8,20], index: 0, kind: input, shape index: {}]
  %s1 = inlined_call_operand.hbm [shape: f32[4,2,5], index: 1, kind: input, shape index: {}]
  %s2 = inlined_call_operand.vmem [shape: f32[4,5], index: 2, kind: input, shape index: {}]
  %s3 = inlined_call_operand.hbm [shape: f32[8,20], index: 3, kind: output, shape index: {}]
  %s4 = sld [smem:[#allocation0]]
  $region30: #{tpu_custom_call.1} parent=0
    _
  %s6 = ssub.s32 1, %s4
  %s7 = scalar_select 0, %s6, %s4
  $region1: #{tpu_custom_call.1} parent=0
    #allocation2 [shape = 'u8[4096]{0}', space=vmem, size = 0x1000, scoped, tag = 'input window, operand 0, single buffered']
    #allocation3 [shape = 's32[1]{0}', space=sflag, size = 0x4, scoped, tag = 'scoped memory for tpu_custom_call.1']
    #allocation4 [shape = 's32[1]{0}', space=sflag, size = 0x4, scoped, tag = 'scoped memory for tpu_custom_call.1']
    #allocation5 [shape = 'u8[4096]{0}', space=vmem, size = 0x1000, scoped, tag = 'input window, operand 1, single buffered']
    #allocation6 [shape = 's32[1]{0}', space=sflag, size = 0x4, scoped, tag = 'scoped memory for tpu_custom_call.1']
    #allocation7 [shape = 'u8[4096]{0}', space=vmem, size = 0x1000, scoped, tag = 'output window, operand 0, single buffered']
    %8 = vsyncpa [#allocation3], 0
    %9 = vsyncpa [#allocation6], 0
    %10 = vsyncpa [#allocation4], 0
    // Predicated region
    $region2: #{tpu_custom_call.1} parent=1 // pred_check
      _
    $region3: #{tpu_custom_call.1} parent=1 // pred_check_branch
      %12 = sbr.rel (0) target = $region5
    $region4: #{tpu_custom_call.1} parent=1 // pred_region
      %s14 = ssub.s32 128, 128
      %15 = vsyncadd [#allocation3], %s14
      %s17 = sshll.u32 [#allocation2], 4
      %s18 = int_to_ptr.vmem [resolvable:$true] %s17
      %20 = dma.hbm_to_vmem [thread:$0]  %s0, 128, %s18, [#allocation3]
    $region5: #{tpu_custom_call.1} parent=1 // pred_fallthru
      _
    // Predicated region
    $region6: #{tpu_custom_call.1} parent=1 // pred_check
      _
    $region7: #{tpu_custom_call.1} parent=1 // pred_check_branch
      %22 = sbr.rel (0) target = $region9
    $region8: #{tpu_custom_call.1} parent=1 // pred_region
      %s24 = ssub.s32 128, 128
      %25 = vsyncadd [#allocation6], %s24
      %s26 = sshll.u32 [#allocation5], 4
      %s27 = int_to_ptr.vmem [resolvable:$true] %s26
      %32 = dma.hbm_to_vmem [thread:$0]  %s1, 128, %s27, [#allocation6], 32, 32, 2
    $region9: #{tpu_custom_call.1} parent=1 // pred_fallthru
      _
    // Predicated region
    $region10: #{tpu_custom_call.1} parent=1 // pred_check
      _
    $region11: #{tpu_custom_call.1} parent=1 // pred_check_branch
      %34 = sbr.rel (0) target = $region13
    $region12: #{tpu_custom_call.1} parent=1 // pred_region
      _
    $region13: #{tpu_custom_call.1} parent=1 // pred_fallthru
      _
    // Predicated region
    $region14: #{tpu_custom_call.1} parent=1 // pred_check
      _
    $region15: #{tpu_custom_call.1} parent=1 // pred_check_branch
      %36 = sbr.rel (0) target = $region17
    $region16: #{tpu_custom_call.1} parent=1 // pred_region
      %37 = dma.done [#allocation3], 128
    $region17: #{tpu_custom_call.1} parent=1 // pred_fallthru
      _
    // Predicated region
    $region18: #{tpu_custom_call.1} parent=1 // pred_check
      _
    $region19: #{tpu_custom_call.1} parent=1 // pred_check_branch
      %39 = sbr.rel (0) target = $region21
    $region20: #{tpu_custom_call.1} parent=1 // pred_region
      %40 = dma.done [#allocation6], 128
    $region21: #{tpu_custom_call.1} parent=1 // pred_fallthru
      _
    %v41 = vld [vmem:[#allocation2] sm:$0xff]
    %v42 = vld [vmem:[#allocation5] sm:$0x3]
    %v43 = vld [vmem:[#allocation5 + $0x2] sm:$0x3]
    %v44 = vld [vmem:[#allocation5 + $0x4] sm:$0x3]
    %v45 = vld [vmem:[#allocation5 + $0x6] sm:$0x3]
    %v46 = vld [vmem:[%s2] sm:$0xf]
    %vm47 = vcmask 39936
    %v49 = vsel %vm47, %v41, 0
    %v52 = vsel %vm47, %v42, 0
    %54 = vmatprep.subr.mxu0 0.0
    %55 = vmatpush1.xpose.msra.mxu0 %v52
    %56 = vmatprep.subr.mxu0 0.0
    %57 = vmatpush1.xpose.msra.mxu0 0.0
    %58 = vmatprep.subr.mxu0 0.0
    %59 = vmatpush1.xpose.msra.mxu0 0.0
    %60 = vmatprep.subr.mxu0 0.0
    %61 = vmatpush1.xpose.msra.mxu0 0.0
    %62 = vmatprep.subr.mxu0 0.0
    %63 = vmatpush1.xpose.msra.mxu0 0.0
    %64 = vmatprep.subr.mxu0 0.0
    %65 = vmatpush1.xpose.msra.mxu0 0.0
    %66 = vmatprep.subr.mxu0 0.0
    %67 = vmatpush1.xpose.msra.mxu0 0.0
    %68 = vmatprep.subr.mxu0 0.0
    %69 = vmatpush1.xpose.msra.mxu0 0.0
    %70 = vmatprep.subr.mxu0 0.0
    %71 = vmatpush1.xpose.msra.mxu0 0.0
    %72 = vmatprep.subr.mxu0 0.0
    %73 = vmatpush1.xpose.msra.mxu0 0.0
    %74 = vmatprep.subr.mxu0 0.0
    %75 = vmatpush1.xpose.msra.mxu0 0.0
    %76 = vmatprep.subr.mxu0 0.0
    %77 = vmatpush1.xpose.msra.mxu0 0.0
    %78 = vmatprep.subr.mxu0 0.0
    %79 = vmatpush1.xpose.msra.mxu0 0.0
    %80 = vmatprep.subr.mxu0 0.0
    %81 = vmatpush1.xpose.msra.mxu0 0.0
    %82 = vmatprep.subr.mxu0 0.0
    %83 = vmatpush1.xpose.msra.mxu0 0.0
    %84 = vmatprep.subr.mxu0 0.0
    %85 = vmatpush1.xpose.msra.mxu0 0.0
    %86 = vmatprep.subr.mxu0 0.0
    %87 = vmatpush1.xpose.msra.mxu0 0.0
    %88 = vmatprep.subr.mxu0 0.0
    %89 = vmatpush1.xpose.msra.mxu0 0.0
    %90 = vmatprep.subr.mxu0 0.0
    %91 = vmatpush1.xpose.msra.mxu0 0.0
    %92 = vmatprep.subr.mxu0 0.0
    %93 = vmatpush1.xpose.msra.mxu0 0.0
    %94 = vmatprep.subr.mxu0 0.0
    %95 = vmatpush1.xpose.msra.mxu0 0.0
    %96 = vmatprep.subr.mxu0 0.0
    %97 = vmatpush1.xpose.msra.mxu0 0.0
    %98 = vmatprep.subr.mxu0 0.0
    %99 = vmatpush1.xpose.msra.mxu0 0.0
    %100 = vmatprep.subr.mxu0 0.0
    %101 = vmatpush1.xpose.msra.mxu0 0.0
    %102 = vmatprep.subr.mxu0 0.0
    %103 = vmatpush1.xpose.msra.mxu0 0.0
    %104 = vmatprep.subr.mxu0 0.0
    %105 = vmatpush1.xpose.msra.mxu0 0.0
    %106 = vmatprep.subr.mxu0 0.0
    %107 = vmatpush1.xpose.msra.mxu0 0.0
    %108 = vmatprep.subr.mxu0 0.0
    %109 = vmatpush1.xpose.msra.mxu0 0.0
    %110 = vmatprep.subr.mxu0 0.0
    %111 = vmatpush1.xpose.msra.mxu0 0.0
    %112 = vmatprep.subr.mxu0 0.0
    %113 = vmatpush1.xpose.msra.mxu0 0.0
    %114 = vmatprep.subr.mxu0 0.0
    %115 = vmatpush1.xpose.msra.mxu0 0.0
    %116 = vmatprep.subr.mxu0 0.0
    %117 = vmatpush1.xpose.msra.mxu0 0.0
    %118 = vmatprep.mubr.f32.mxu0 0.0
    %119 = vmatmul.mubr.f32.gmra.mrb[0].mxu0 %v49
    %v120 = vpop.f32.mrb[0].mxu0
    %v121 = vadd.f32 0.0, %v120
    %v122 = vpop.f32.mrb[0].mxu0
    %123 = vdwg.mxu0
    %v124 = vlaneseq
    %v125 = vshrl.u32 %v124, 7
    %v126 = vsub.s32 0, %v125
    %v127 = vrot.slane %v46, %v126
    %vm128 = vcmask 15360
    %v130 = vsel %vm128, %v121, 0
    %vm132 = vcmask 1041408
    %v133 = vsel %vm132, %v42, 0
    %135 = vmatprep.subr.mxu0 0.0
    %136 = vmatpush1.msra.mxu0 %v133
    %137 = vmatprep.subr.mxu0 0.0
    %138 = vmatpush1.msra.mxu0 0.0
    %139 = vmatprep.subr.mxu0 0.0
    %140 = vmatpush1.msra.mxu0 0.0
    %141 = vmatprep.subr.mxu0 0.0
    %142 = vmatpush1.msra.mxu0 0.0
    %143 = vmatprep.subr.mxu0 0.0
    %144 = vmatpush1.msra.mxu0 0.0
    %145 = vmatprep.subr.mxu0 0.0
    %146 = vmatpush1.msra.mxu0 0.0
    %147 = vmatprep.subr.mxu0 0.0
    %148 = vmatpush1.msra.mxu0 0.0
    %149 = vmatprep.subr.mxu0 0.0
    %150 = vmatpush1.msra.mxu0 0.0
    %151 = vmatprep.subr.mxu0 0.0
    %152 = vmatpush1.msra.mxu0 0.0
    %153 = vmatprep.subr.mxu0 0.0
    %154 = vmatpush1.msra.mxu0 0.0
    %155 = vmatprep.subr.mxu0 0.0
    %156 = vmatpush1.msra.mxu0 0.0
    %157 = vmatprep.subr.mxu0 0.0
    %158 = vmatpush1.msra.mxu0 0.0
    %159 = vmatprep.subr.mxu0 0.0
    %160 = vmatpush1.msra.mxu0 0.0
    %161 = vmatprep.subr.mxu0 0.0
    %162 = vmatpush1.msra.mxu0 0.0
    %163 = vmatprep.subr.mxu0 0.0
    %164 = vmatpush1.msra.mxu0 0.0
    %165 = vmatprep.subr.mxu0 0.0
    %166 = vmatpush1.msra.mxu0 0.0
    %167 = vmatprep.subr.mxu0 0.0
    %168 = vmatpush1.msra.mxu0 0.0
    %169 = vmatprep.subr.mxu0 0.0
    %170 = vmatpush1.msra.mxu0 0.0
    %171 = vmatprep.subr.mxu0 0.0
    %172 = vmatpush1.msra.mxu0 0.0
    %173 = vmatprep.subr.mxu0 0.0
    %174 = vmatpush1.msra.mxu0 0.0
    %175 = vmatprep.subr.mxu0 0.0
    %176 = vmatpush1.msra.mxu0 0.0
    %177 = vmatprep.subr.mxu0 0.0
    %178 = vmatpush1.msra.mxu0 0.0
    %179 = vmatprep.subr.mxu0 0.0
    %180 = vmatpush1.msra.mxu0 0.0
    %181 = vmatprep.subr.mxu0 0.0
    %182 = vmatpush1.msra.mxu0 0.0
    %183 = vmatprep.subr.mxu0 0.0
    %184 = vmatpush1.msra.mxu0 0.0
    %185 = vmatprep.subr.mxu0 0.0
    %186 = vmatpush1.msra.mxu0 0.0
    %187 = vmatprep.subr.mxu0 0.0
    %188 = vmatpush1.msra.mxu0 0.0
    %189 = vmatprep.subr.mxu0 0.0
    %190 = vmatpush1.msra.mxu0 0.0
    %191 = vmatprep.subr.mxu0 0.0
    %192 = vmatpush1.msra.mxu0 0.0
    %193 = vmatprep.subr.mxu0 0.0
    %194 = vmatpush1.msra.mxu0 0.0
    %195 = vmatprep.subr.mxu0 0.0
    %196 = vmatpush1.msra.mxu0 0.0
    %197 = vmatprep.subr.mxu0 0.0
    %198 = vmatpush1.msra.mxu0 0.0
    %199 = vmatprep.mubr.f32.mxu0 0.0
    %200 = vmatmul.mubr.f32.gmra.mrb[0].mxu0 %v130
    %v201 = vpop.f32.mrb[0].mxu0
    %v202 = vadd.f32 %v127, %v201
    %v203 = vpop.f32.mrb[0].mxu0
    %204 = vdwg.mxu0
    %v205 = vmax.f32 %v202, 0.0
    %206 = vst.msk [vmem:[#allocation7] sm:$0xff] %vm47, %v205
    %207 = vrot.lane.b32.xlu0 %v41, 123
    %v208 = vpop.permute.xlu0 %207
    %v209 = vsel %vm47, %v208, 0
    %v212 = vsel %vm47, %v43, 0
    %214 = vmatprep.subr.mxu0 0.0
    %215 = vmatpush1.xpose.msra.mxu0 %v212
    %216 = vmatprep.subr.mxu0 0.0
    %217 = vmatpush1.xpose.msra.mxu0 0.0
    %218 = vmatprep.subr.mxu0 0.0
    %219 = vmatpush1.xpose.msra.mxu0 0.0
    %220 = vmatprep.subr.mxu0 0.0
    %221 = vmatpush1.xpose.msra.mxu0 0.0
    %222 = vmatprep.subr.mxu0 0.0
    %223 = vmatpush1.xpose.msra.mxu0 0.0
    %224 = vmatprep.subr.mxu0 0.0
    %225 = vmatpush1.xpose.msra.mxu0 0.0
    %226 = vmatprep.subr.mxu0 0.0
    %227 = vmatpush1.xpose.msra.mxu0 0.0
    %228 = vmatprep.subr.mxu0 0.0
    %229 = vmatpush1.xpose.msra.mxu0 0.0
    %230 = vmatprep.subr.mxu0 0.0
    %231 = vmatpush1.xpose.msra.mxu0 0.0
    %232 = vmatprep.subr.mxu0 0.0
    %233 = vmatpush1.xpose.msra.mxu0 0.0
    %234 = vmatprep.subr.mxu0 0.0
    %235 = vmatpush1.xpose.msra.mxu0 0.0
    %236 = vmatprep.subr.mxu0 0.0
    %237 = vmatpush1.xpose.msra.mxu0 0.0
    %238 = vmatprep.subr.mxu0 0.0
    %239 = vmatpush1.xpose.msra.mxu0 0.0
    %240 = vmatprep.subr.mxu0 0.0
    %241 = vmatpush1.xpose.msra.mxu0 0.0
    %242 = vmatprep.subr.mxu0 0.0
    %243 = vmatpush1.xpose.msra.mxu0 0.0
    %244 = vmatprep.subr.mxu0 0.0
    %245 = vmatpush1.xpose.msra.mxu0 0.0
    %246 = vmatprep.subr.mxu0 0.0
    %247 = vmatpush1.xpose.msra.mxu0 0.0
    %248 = vmatprep.subr.mxu0 0.0
    %249 = vmatpush1.xpose.msra.mxu0 0.0
    %250 = vmatprep.subr.mxu0 0.0
    %251 = vmatpush1.xpose.msra.mxu0 0.0
    %252 = vmatprep.subr.mxu0 0.0
    %253 = vmatpush1.xpose.msra.mxu0 0.0
    %254 = vmatprep.subr.mxu0 0.0
    %255 = vmatpush1.xpose.msra.mxu0 0.0
    %256 = vmatprep.subr.mxu0 0.0
    %257 = vmatpush1.xpose.msra.mxu0 0.0
    %258 = vmatprep.subr.mxu0 0.0
    %259 = vmatpush1.xpose.msra.mxu0 0.0
    %260 = vmatprep.subr.mxu0 0.0
    %261 = vmatpush1.xpose.msra.mxu0 0.0
    %262 = vmatprep.subr.mxu0 0.0
    %263 = vmatpush1.xpose.msra.mxu0 0.0
    %264 = vmatprep.subr.mxu0 0.0
    %265 = vmatpush1.xpose.msra.mxu0 0.0
    %266 = vmatprep.subr.mxu0 0.0
    %267 = vmatpush1.xpose.msra.mxu0 0.0
    %268 = vmatprep.subr.mxu0 0.0
    %269 = vmatpush1.xpose.msra.mxu0 0.0
    %270 = vmatprep.subr.mxu0 0.0
    %271 = vmatpush1.xpose.msra.mxu0 0.0
    %272 = vmatprep.subr.mxu0 0.0
    %273 = vmatpush1.xpose.msra.mxu0 0.0
    %274 = vmatprep.subr.mxu0 0.0
    %275 = vmatpush1.xpose.msra.mxu0 0.0
    %276 = vmatprep.subr.mxu0 0.0
    %277 = vmatpush1.xpose.msra.mxu0 0.0
    %278 = vmatprep.mubr.f32.mxu0 0.0
    %279 = vmatmul.mubr.f32.gmra.mrb[0].mxu0 %v209
    %v280 = vpop.f32.mrb[0].mxu0
    %v281 = vadd.f32 0.0, %v280
    %v282 = vpop.f32.mrb[0].mxu0
    %283 = vdwg.mxu0
    %v284 = vlaneseq
    %v285 = vshrl.u32 %v284, 7
    %v286 = vsub.s32 1, %v285
    %v287 = vrot.slane %v46, %v286
    %v289 = vsel %vm128, %v281, 0
    %v291 = vsel %vm132, %v43, 0
    %293 = vmatprep.subr.mxu0 0.0
    %294 = vmatpush1.msra.mxu0 %v291
    %295 = vmatprep.subr.mxu0 0.0
    %296 = vmatpush1.msra.mxu0 0.0
    %297 = vmatprep.subr.mxu0 0.0
    %298 = vmatpush1.msra.mxu0 0.0
    %299 = vmatprep.subr.mxu0 0.0
    %300 = vmatpush1.msra.mxu0 0.0
    %301 = vmatprep.subr.mxu0 0.0
    %302 = vmatpush1.msra.mxu0 0.0
    %303 = vmatprep.subr.mxu0 0.0
    %304 = vmatpush1.msra.mxu0 0.0
    %305 = vmatprep.subr.mxu0 0.0
    %306 = vmatpush1.msra.mxu0 0.0
    %307 = vmatprep.subr.mxu0 0.0
    %308 = vmatpush1.msra.mxu0 0.0
    %309 = vmatprep.subr.mxu0 0.0
    %310 = vmatpush1.msra.mxu0 0.0
    %311 = vmatprep.subr.mxu0 0.0
    %312 = vmatpush1.msra.mxu0 0.0
    %313 = vmatprep.subr.mxu0 0.0
    %314 = vmatpush1.msra.mxu0 0.0
    %315 = vmatprep.subr.mxu0 0.0
    %316 = vmatpush1.msra.mxu0 0.0
    %317 = vmatprep.subr.mxu0 0.0
    %318 = vmatpush1.msra.mxu0 0.0
    %319 = vmatprep.subr.mxu0 0.0
    %320 = vmatpush1.msra.mxu0 0.0
    %321 = vmatprep.subr.mxu0 0.0
    %322 = vmatpush1.msra.mxu0 0.0
    %323 = vmatprep.subr.mxu0 0.0
    %324 = vmatpush1.msra.mxu0 0.0
    %325 = vmatprep.subr.mxu0 0.0
    %326 = vmatpush1.msra.mxu0 0.0
    %327 = vmatprep.subr.mxu0 0.0
    %328 = vmatpush1.msra.mxu0 0.0
    %329 = vmatprep.subr.mxu0 0.0
    %330 = vmatpush1.msra.mxu0 0.0
    %331 = vmatprep.subr.mxu0 0.0
    %332 = vmatpush1.msra.mxu0 0.0
    %333 = vmatprep.subr.mxu0 0.0
    %334 = vmatpush1.msra.mxu0 0.0
    %335 = vmatprep.subr.mxu0 0.0
    %336 = vmatpush1.msra.mxu0 0.0
    %337 = vmatprep.subr.mxu0 0.0
    %338 = vmatpush1.msra.mxu0 0.0
    %339 = vmatprep.subr.mxu0 0.0
    %340 = vmatpush1.msra.mxu0 0.0
    %341 = vmatprep.subr.mxu0 0.0
    %342 = vmatpush1.msra.mxu0 0.0
    %343 = vmatprep.subr.mxu0 0.0
    %344 = vmatpush1.msra.mxu0 0.0
    %345 = vmatprep.subr.mxu0 0.0
    %346 = vmatpush1.msra.mxu0 0.0
    %347 = vmatprep.subr.mxu0 0.0
    %348 = vmatpush1.msra.mxu0 0.0
    %349 = vmatprep.subr.mxu0 0.0
    %350 = vmatpush1.msra.mxu0 0.0
    %351 = vmatprep.subr.mxu0 0.0
    %352 = vmatpush1.msra.mxu0 0.0
    %353 = vmatprep.subr.mxu0 0.0
    %354 = vmatpush1.msra.mxu0 0.0
    %355 = vmatprep.subr.mxu0 0.0
    %356 = vmatpush1.msra.mxu0 0.0
    %357 = vmatprep.mubr.f32.mxu0 0.0
    %358 = vmatmul.mubr.f32.gmra.mrb[0].mxu0 %v289
    %v359 = vpop.f32.mrb[0].mxu0
    %v360 = vadd.f32 %v287, %v359
    %v361 = vpop.f32.mrb[0].mxu0
    %362 = vdwg.mxu0
    %v363 = vmax.f32 %v360, 0.0
    %365 = vrot.lane.b32.xlu0 %v363, 5
    %v366 = vpop.permute.xlu0 %365
    %vm368 = vcmask 80936
    %369 = vst.msk [vmem:[#allocation7] sm:$0xff] %vm368, %v366
    %370 = vrot.lane.b32.xlu0 %v41, 118
    %v371 = vpop.permute.xlu0 %370
    %v372 = vsel %vm47, %v371, 0
    %v375 = vsel %vm47, %v44, 0
    %377 = vmatprep.subr.mxu0 0.0
    %378 = vmatpush1.xpose.msra.mxu0 %v375
    %379 = vmatprep.subr.mxu0 0.0
    %380 = vmatpush1.xpose.msra.mxu0 0.0
    %381 = vmatprep.subr.mxu0 0.0
    %382 = vmatpush1.xpose.msra.mxu0 0.0
    %383 = vmatprep.subr.mxu0 0.0
    %384 = vmatpush1.xpose.msra.mxu0 0.0
    %385 = vmatprep.subr.mxu0 0.0
    %386 = vmatpush1.xpose.msra.mxu0 0.0
    %387 = vmatprep.subr.mxu0 0.0
    %388 = vmatpush1.xpose.msra.mxu0 0.0
    %389 = vmatprep.subr.mxu0 0.0
    %390 = vmatpush1.xpose.msra.mxu0 0.0
    %391 = vmatprep.subr.mxu0 0.0
    %392 = vmatpush1.xpose.msra.mxu0 0.0
    %393 = vmatprep.subr.mxu0 0.0
    %394 = vmatpush1.xpose.msra.mxu0 0.0
    %395 = vmatprep.subr.mxu0 0.0
    %396 = vmatpush1.xpose.msra.mxu0 0.0
    %397 = vmatprep.subr.mxu0 0.0
    %398 = vmatpush1.xpose.msra.mxu0 0.0
    %399 = vmatprep.subr.mxu0 0.0
    %400 = vmatpush1.xpose.msra.mxu0 0.0
    %401 = vmatprep.subr.mxu0 0.0
    %402 = vmatpush1.xpose.msra.mxu0 0.0
    %403 = vmatprep.subr.mxu0 0.0
    %404 = vmatpush1.xpose.msra.mxu0 0.0
    %405 = vmatprep.subr.mxu0 0.0
    %406 = vmatpush1.xpose.msra.mxu0 0.0
    %407 = vmatprep.subr.mxu0 0.0
    %408 = vmatpush1.xpose.msra.mxu0 0.0
    %409 = vmatprep.subr.mxu0 0.0
    %410 = vmatpush1.xpose.msra.mxu0 0.0
    %411 = vmatprep.subr.mxu0 0.0
    %412 = vmatpush1.xpose.msra.mxu0 0.0
    %413 = vmatprep.subr.mxu0 0.0
    %414 = vmatpush1.xpose.msra.mxu0 0.0
    %415 = vmatprep.subr.mxu0 0.0
    %416 = vmatpush1.xpose.msra.mxu0 0.0
    %417 = vmatprep.subr.mxu0 0.0
    %418 = vmatpush1.xpose.msra.mxu0 0.0
    %419 = vmatprep.subr.mxu0 0.0
    %420 = vmatpush1.xpose.msra.mxu0 0.0
    %421 = vmatprep.subr.mxu0 0.0
    %422 = vmatpush1.xpose.msra.mxu0 0.0
    %423 = vmatprep.subr.mxu0 0.0
    %424 = vmatpush1.xpose.msra.mxu0 0.0
    %425 = vmatprep.subr.mxu0 0.0
    %426 = vmatpush1.xpose.msra.mxu0 0.0
    %427 = vmatprep.subr.mxu0 0.0
    %428 = vmatpush1.xpose.msra.mxu0 0.0
    %429 = vmatprep.subr.mxu0 0.0
    %430 = vmatpush1.xpose.msra.mxu0 0.0
    %431 = vmatprep.subr.mxu0 0.0
    %432 = vmatpush1.xpose.msra.mxu0 0.0
    %433 = vmatprep.subr.mxu0 0.0
    %434 = vmatpush1.xpose.msra.mxu0 0.0
    %435 = vmatprep.subr.mxu0 0.0
    %436 = vmatpush1.xpose.msra.mxu0 0.0
    %437 = vmatprep.subr.mxu0 0.0
    %438 = vmatpush1.xpose.msra.mxu0 0.0
    %439 = vmatprep.subr.mxu0 0.0
    %440 = vmatpush1.xpose.msra.mxu0 0.0
    %441 = vmatprep.mubr.f32.mxu0 0.0
    %442 = vmatmul.mubr.f32.gmra.mrb[0].mxu0 %v372
    %v443 = vpop.f32.mrb[0].mxu0
    %v444 = vadd.f32 0.0, %v443
    %v445 = vpop.f32.mrb[0].mxu0
    %446 = vdwg.mxu0
    %v447 = vlaneseq
    %v448 = vshrl.u32 %v447, 7
    %v449 = vsub.s32 2, %v448
    %v450 = vrot.slane %v46, %v449
    %v452 = vsel %vm128, %v444, 0
    %v454 = vsel %vm132, %v44, 0
    %456 = vmatprep.subr.mxu0 0.0
    %457 = vmatpush1.msra.mxu0 %v454
    %458 = vmatprep.subr.mxu0 0.0
    %459 = vmatpush1.msra.mxu0 0.0
    %460 = vmatprep.subr.mxu0 0.0
    %461 = vmatpush1.msra.mxu0 0.0
    %462 = vmatprep.subr.mxu0 0.0
    %463 = vmatpush1.msra.mxu0 0.0
    %464 = vmatprep.subr.mxu0 0.0
    %465 = vmatpush1.msra.mxu0 0.0
    %466 = vmatprep.subr.mxu0 0.0
    %467 = vmatpush1.msra.mxu0 0.0
    %468 = vmatprep.subr.mxu0 0.0
    %469 = vmatpush1.msra.mxu0 0.0
    %470 = vmatprep.subr.mxu0 0.0
    %471 = vmatpush1.msra.mxu0 0.0
    %472 = vmatprep.subr.mxu0 0.0
    %473 = vmatpush1.msra.mxu0 0.0
    %474 = vmatprep.subr.mxu0 0.0
    %475 = vmatpush1.msra.mxu0 0.0
    %476 = vmatprep.subr.mxu0 0.0
    %477 = vmatpush1.msra.mxu0 0.0
    %478 = vmatprep.subr.mxu0 0.0
    %479 = vmatpush1.msra.mxu0 0.0
    %480 = vmatprep.subr.mxu0 0.0
    %481 = vmatpush1.msra.mxu0 0.0
    %482 = vmatprep.subr.mxu0 0.0
    %483 = vmatpush1.msra.mxu0 0.0
    %484 = vmatprep.subr.mxu0 0.0
    %485 = vmatpush1.msra.mxu0 0.0
    %486 = vmatprep.subr.mxu0 0.0
    %487 = vmatpush1.msra.mxu0 0.0
    %488 = vmatprep.subr.mxu0 0.0
    %489 = vmatpush1.msra.mxu0 0.0
    %490 = vmatprep.subr.mxu0 0.0
    %491 = vmatpush1.msra.mxu0 0.0
    %492 = vmatprep.subr.mxu0 0.0
    %493 = vmatpush1.msra.mxu0 0.0
    %494 = vmatprep.subr.mxu0 0.0
    %495 = vmatpush1.msra.mxu0 0.0
    %496 = vmatprep.subr.mxu0 0.0
    %497 = vmatpush1.msra.mxu0 0.0
    %498 = vmatprep.subr.mxu0 0.0
    %499 = vmatpush1.msra.mxu0 0.0
    %500 = vmatprep.subr.mxu0 0.0
    %501 = vmatpush1.msra.mxu0 0.0
    %502 = vmatprep.subr.mxu0 0.0
    %503 = vmatpush1.msra.mxu0 0.0
    %504 = vmatprep.subr.mxu0 0.0
    %505 = vmatpush1.msra.mxu0 0.0
    %506 = vmatprep.subr.mxu0 0.0
    %507 = vmatpush1.msra.mxu0 0.0
    %508 = vmatprep.subr.mxu0 0.0
    %509 = vmatpush1.msra.mxu0 0.0
    %510 = vmatprep.subr.mxu0 0.0
    %511 = vmatpush1.msra.mxu0 0.0
    %512 = vmatprep.subr.mxu0 0.0
    %513 = vmatpush1.msra.mxu0 0.0
    %514 = vmatprep.subr.mxu0 0.0
    %515 = vmatpush1.msra.mxu0 0.0
    %516 = vmatprep.subr.mxu0 0.0
    %517 = vmatpush1.msra.mxu0 0.0
    %518 = vmatprep.subr.mxu0 0.0
    %519 = vmatpush1.msra.mxu0 0.0
    %520 = vmatprep.mubr.f32.mxu0 0.0
    %521 = vmatmul.mubr.f32.gmra.mrb[0].mxu0 %v452
    %v522 = vpop.f32.mrb[0].mxu0
    %v523 = vadd.f32 %v450, %v522
    %v524 = vpop.f32.mrb[0].mxu0
    %525 = vdwg.mxu0
    %v526 = vmax.f32 %v523, 0.0
    %528 = vrot.lane.b32.xlu0 %v526, 10
    %v529 = vpop.permute.xlu0 %528
    %vm531 = vcmask 121936
    %532 = vst.msk [vmem:[#allocation7] sm:$0xff] %vm531, %v529
    %533 = vrot.lane.b32.xlu0 %v41, 113
    %v534 = vpop.permute.xlu0 %533
    %v535 = vsel %vm47, %v534, 0
    %v538 = vsel %vm47, %v45, 0
    %540 = vmatprep.subr.mxu0 0.0
    %541 = vmatpush1.xpose.msra.mxu0 %v538
    %542 = vmatprep.subr.mxu0 0.0
    %543 = vmatpush1.xpose.msra.mxu0 0.0
    %544 = vmatprep.subr.mxu0 0.0
    %545 = vmatpush1.xpose.msra.mxu0 0.0
    %546 = vmatprep.subr.mxu0 0.0
    %547 = vmatpush1.xpose.msra.mxu0 0.0
    %548 = vmatprep.subr.mxu0 0.0
    %549 = vmatpush1.xpose.msra.mxu0 0.0
    %550 = vmatprep.subr.mxu0 0.0
    %551 = vmatpush1.xpose.msra.mxu0 0.0
    %552 = vmatprep.subr.mxu0 0.0
    %553 = vmatpush1.xpose.msra.mxu0 0.0
    %554 = vmatprep.subr.mxu0 0.0
    %555 = vmatpush1.xpose.msra.mxu0 0.0
    %556 = vmatprep.subr.mxu0 0.0
    %557 = vmatpush1.xpose.msra.mxu0 0.0
    %558 = vmatprep.subr.mxu0 0.0
    %559 = vmatpush1.xpose.msra.mxu0 0.0
    %560 = vmatprep.subr.mxu0 0.0
    %561 = vmatpush1.xpose.msra.mxu0 0.0
    %562 = vmatprep.subr.mxu0 0.0
    %563 = vmatpush1.xpose.msra.mxu0 0.0
    %564 = vmatprep.subr.mxu0 0.0
    %565 = vmatpush1.xpose.msra.mxu0 0.0
    %566 = vmatprep.subr.mxu0 0.0
    %567 = vmatpush1.xpose.msra.mxu0 0.0
    %568 = vmatprep.subr.mxu0 0.0
    %569 = vmatpush1.xpose.msra.mxu0 0.0
    %570 = vmatprep.subr.mxu0 0.0
    %571 = vmatpush1.xpose.msra.mxu0 0.0
    %572 = vmatprep.subr.mxu0 0.0
    %573 = vmatpush1.xpose.msra.mxu0 0.0
    %574 = vmatprep.subr.mxu0 0.0
    %575 = vmatpush1.xpose.msra.mxu0 0.0
    %576 = vmatprep.subr.mxu0 0.0
    %577 = vmatpush1.xpose.msra.mxu0 0.0
    %578 = vmatprep.subr.mxu0 0.0
    %579 = vmatpush1.xpose.msra.mxu0 0.0
    %580 = vmatprep.subr.mxu0 0.0
    %581 = vmatpush1.xpose.msra.mxu0 0.0
    %582 = vmatprep.subr.mxu0 0.0
    %583 = vmatpush1.xpose.msra.mxu0 0.0
    %584 = vmatprep.subr.mxu0 0.0
    %585 = vmatpush1.xpose.msra.mxu0 0.0
    %586 = vmatprep.subr.mxu0 0.0
    %587 = vmatpush1.xpose.msra.mxu0 0.0
    %588 = vmatprep.subr.mxu0 0.0
    %589 = vmatpush1.xpose.msra.mxu0 0.0
    %590 = vmatprep.subr.mxu0 0.0
    %591 = vmatpush1.xpose.msra.mxu0 0.0
    %592 = vmatprep.subr.mxu0 0.0
    %593 = vmatpush1.xpose.msra.mxu0 0.0
    %594 = vmatprep.subr.mxu0 0.0
    %595 = vmatpush1.xpose.msra.mxu0 0.0
    %596 = vmatprep.subr.mxu0 0.0
    %597 = vmatpush1.xpose.msra.mxu0 0.0
    %598 = vmatprep.subr.mxu0 0.0
    %599 = vmatpush1.xpose.msra.mxu0 0.0
    %600 = vmatprep.subr.mxu0 0.0
    %601 = vmatpush1.xpose.msra.mxu0 0.0
    %602 = vmatprep.subr.mxu0 0.0
    %603 = vmatpush1.xpose.msra.mxu0 0.0
    %604 = vmatprep.mubr.f32.mxu0 0.0
    %605 = vmatmul.mubr.f32.gmra.mrb[0].mxu0 %v535
    %v606 = vpop.f32.mrb[0].mxu0
    %v607 = vadd.f32 0.0, %v606
    %v608 = vpop.f32.mrb[0].mxu0
    %609 = vdwg.mxu0
    %v610 = vlaneseq
    %v611 = vshrl.u32 %v610, 7
    %v612 = vsub.s32 3, %v611
    %v613 = vrot.slane %v46, %v612
    %v615 = vsel %vm128, %v607, 0
    %v617 = vsel %vm132, %v45, 0
    %619 = vmatprep.subr.mxu0 0.0
    %620 = vmatpush1.msra.mxu0 %v617
    %621 = vmatprep.subr.mxu0 0.0
    %622 = vmatpush1.msra.mxu0 0.0
    %623 = vmatprep.subr.mxu0 0.0
    %624 = vmatpush1.msra.mxu0 0.0
    %625 = vmatprep.subr.mxu0 0.0
    %626 = vmatpush1.msra.mxu0 0.0
    %627 = vmatprep.subr.mxu0 0.0
    %628 = vmatpush1.msra.mxu0 0.0
    %629 = vmatprep.subr.mxu0 0.0
    %630 = vmatpush1.msra.mxu0 0.0
    %631 = vmatprep.subr.mxu0 0.0
    %632 = vmatpush1.msra.mxu0 0.0
    %633 = vmatprep.subr.mxu0 0.0
    %634 = vmatpush1.msra.mxu0 0.0
    %635 = vmatprep.subr.mxu0 0.0
    %636 = vmatpush1.msra.mxu0 0.0
    %637 = vmatprep.subr.mxu0 0.0
    %638 = vmatpush1.msra.mxu0 0.0
    %639 = vmatprep.subr.mxu0 0.0
    %640 = vmatpush1.msra.mxu0 0.0
    %641 = vmatprep.subr.mxu0 0.0
    %642 = vmatpush1.msra.mxu0 0.0
    %643 = vmatprep.subr.mxu0 0.0
    %644 = vmatpush1.msra.mxu0 0.0
    %645 = vmatprep.subr.mxu0 0.0
    %646 = vmatpush1.msra.mxu0 0.0
    %647 = vmatprep.subr.mxu0 0.0
    %648 = vmatpush1.msra.mxu0 0.0
    %649 = vmatprep.subr.mxu0 0.0
    %650 = vmatpush1.msra.mxu0 0.0
    %651 = vmatprep.subr.mxu0 0.0
    %652 = vmatpush1.msra.mxu0 0.0
    %653 = vmatprep.subr.mxu0 0.0
    %654 = vmatpush1.msra.mxu0 0.0
    %655 = vmatprep.subr.mxu0 0.0
    %656 = vmatpush1.msra.mxu0 0.0
    %657 = vmatprep.subr.mxu0 0.0
    %658 = vmatpush1.msra.mxu0 0.0
    %659 = vmatprep.subr.mxu0 0.0
    %660 = vmatpush1.msra.mxu0 0.0
    %661 = vmatprep.subr.mxu0 0.0
    %662 = vmatpush1.msra.mxu0 0.0
    %663 = vmatprep.subr.mxu0 0.0
    %664 = vmatpush1.msra.mxu0 0.0
    %665 = vmatprep.subr.mxu0 0.0
    %666 = vmatpush1.msra.mxu0 0.0
    %667 = vmatprep.subr.mxu0 0.0
    %668 = vmatpush1.msra.mxu0 0.0
    %669 = vmatprep.subr.mxu0 0.0
    %670 = vmatpush1.msra.mxu0 0.0
    %671 = vmatprep.subr.mxu0 0.0
    %672 = vmatpush1.msra.mxu0 0.0
    %673 = vmatprep.subr.mxu0 0.0
    %674 = vmatpush1.msra.mxu0 0.0
    %675 = vmatprep.subr.mxu0 0.0
    %676 = vmatpush1.msra.mxu0 0.0
    %677 = vmatprep.subr.mxu0 0.0
    %678 = vmatpush1.msra.mxu0 0.0
    %679 = vmatprep.subr.mxu0 0.0
    %680 = vmatpush1.msra.mxu0 0.0
    %681 = vmatprep.subr.mxu0 0.0
    %682 = vmatpush1.msra.mxu0 0.0
    %683 = vmatprep.mubr.f32.mxu0 0.0
    %684 = vmatmul.mubr.f32.gmra.mrb[0].mxu0 %v615
    %v685 = vpop.f32.mrb[0].mxu0
    %v686 = vadd.f32 %v613, %v685
    %v687 = vpop.f32.mrb[0].mxu0
    %688 = vdwg.mxu0
    %v689 = vmax.f32 %v686, 0.0
    %691 = vrot.lane.b32.xlu0 %v689, 15
    %v692 = vpop.permute.xlu0 %691
    %vm694 = vcmask 162936
    %695 = vst.msk [vmem:[#allocation7] sm:$0xff] %vm694, %v692
    // Predicated region
    $region22: #{tpu_custom_call.1} parent=1 // pred_check
      _
    $region23: #{tpu_custom_call.1} parent=1 // pred_check_branch
      %697 = sbr.rel (0) target = $region25
    $region24: #{tpu_custom_call.1} parent=1 // pred_region
      %s699 = ssub.s32 128, 128
      %700 = vsyncadd [#allocation4], %s699
      %s702 = sshll.u32 [#allocation7], 4
      %s703 = int_to_ptr.vmem [resolvable:$true] %s702
      %705 = dma.vmem_to_hbm [thread:$0]  %s703, 128, %s3, [#allocation4]
    $region25: #{tpu_custom_call.1} parent=1 // pred_fallthru
      _
    // Predicated region
    $region26: #{tpu_custom_call.1} parent=1 // pred_check
      _
    $region27: #{tpu_custom_call.1} parent=1 // pred_check_branch
      %707 = sbr.rel (0) target = $region29
    $region28: #{tpu_custom_call.1} parent=1 // pred_region
      %708 = dma.done [#allocation4], 128
    $region29: #{tpu_custom_call.1} parent=1 // pred_fallthru
      _
    %709 = vsyncpa [#allocation3], 1
    %710 = vsyncpa [#allocation6], 1
    %711 = vsyncpa [#allocation4], 1

</llo_original>
